<compile_context>
chip_gen: v5e
topology: v5e:2x2
jax: 0.10.0
libtpu: 0.0.40
codegen_flags: <defaults>
</compile_context>

<pallas_src>
import functools

import jax
import jax.numpy as jnp
from jax.experimental import pallas as pl
from jax.experimental.pallas import tpu as pltpu


def _round_up(x, m):
    return ((x + m - 1) // m) * m


def _mm_to_transposed(w, h, h_is_transposed):
    """Matmul that always produces a (dout, tm) (feature-major) result.

    w: (dout, din) bf16, torch-native layout.
    h: (din, tm) bf16 if h_is_transposed else (tm, din) bf16 (natural x tile).
    """
    if h_is_transposed:
        return jnp.dot(w, h, preferred_element_type=jnp.float32)
    # Contract the feature axes of both operands (flash-attention NT pattern);
    # avoids materialising a transpose of the large (tm, din) activation tile.
    return jax.lax.dot_general(
        w, h, dimension_numbers=(((1,), (1,)), ((), ())),
        preferred_element_type=jnp.float32)


def _qnet_kernel(*refs, n_core_layers, dueling, softmax, activ_last_core,
                 action_dim):
    """refs = (x, w0, b0, w1, b1, ..., [w_head, b_head], out).

    x block:    (tm, state_dim)   natural HBM layout (contiguous DMA).
    w_i:        (dout, din)       bf16, torch-native, VMEM-resident.
    b_i:        (dout, 1)         f32 (lane-broadcast when added).
    out block:  (action_dim, tm)  transposed -> lane-dense, unmasked store.
    """
    x_ref = refs[0]
    out_ref = refs[-1]
    params = refs[1:-1]

    h = x_ref[...]                    # f32 (tm, state_dim); cast once below
    transposed = False

    idx = 0
    for i in range(n_core_layers):
        w = params[idx][...]          # bf16
        b = params[idx + 1][...]      # f32 (dout, 1)
        idx += 2
        h = _mm_to_transposed(w, h.astype(jnp.bfloat16), transposed) + b
        transposed = True
        if (i != n_core_layers - 1) or activ_last_core:
            h = jnp.maximum(h, 0.0)   # ReLU
            # TODO(synk): only the default nn.ReLU() activation is implemented.

    if dueling:
        # Fused heads: rows [0, A) = advantage, row A = value -> one MXU op.
        w_head = params[idx][...]      # (A+1, core_out) bf16
        b_head = params[idx + 1][...]  # (A+1, 1) f32
        y = _mm_to_transposed(w_head, h.astype(jnp.bfloat16), transposed) + b_head
        adv = y[:action_dim, :]                       # (A, tm)
        v = y[action_dim:action_dim + 1, :]           # (1, tm) sublane slice
        mean_adv = jnp.sum(adv, axis=0, keepdims=True) * (1.0 / float(action_dim))
        logits = v + adv - mean_adv                   # (A, tm)
    else:
        logits = h                                    # (A, tm)

    if softmax:
        m = jnp.max(logits, axis=0, keepdims=True)
        e = jnp.exp(logits - m)
        # approx reciprocal -> rows sum to 1 within ~1e-3 (fine for inference).
        logits = e * pl.reciprocal(jnp.sum(e, axis=0, keepdims=True),
                                   approx=True)

    out_ref[...] = logits.astype(out_ref.dtype)


@functools.partial(
    jax.jit,
    static_argnames=("n_core_layers", "dueling", "softmax", "action_dim"),
)
def _qnet_forward(x, params, *, n_core_layers, dueling, softmax, action_dim):
    batch, state_dim = x.shape

    # Batch tile = lane extent of the transposed output block.
    #  * batch <= 128: one full-array block (exempt from 8/128 alignment).
    #  * batch  > 128: 128-aligned tiles sized for >= 2 roughly balanced grid
    #    steps (both v7x TensorCores get work), capped at 4096 rows — a
    #    4096 x state_dim f32 x-tile double-buffered is only a few MiB of VMEM.
    if batch <= 128:
        tm = batch
    else:
        tm = min(4096, _round_up(-(-batch // 2), 128))
    grid = (pl.cdiv(batch, tm),)

    # x / out: blocked along batch (Pallas masks the partial last block).
    # Params: full-array blocks with constant index_map -> fetched once and
    # kept VMEM-resident across grid steps.
    in_specs = [pl.BlockSpec((tm, state_dim), lambda i: (i, 0))]
    for p in params:
        in_specs.append(pl.BlockSpec(p.shape, lambda i: (0, 0)))
    out_spec = pl.BlockSpec((action_dim, tm), lambda i: (0, i))

    kernel = functools.partial(
        _qnet_kernel,
        n_core_layers=n_core_layers,
        dueling=dueling,
        softmax=softmax,
        activ_last_core=dueling,   # dueling core uses activ_last_layer=True
        action_dim=action_dim,
    )

    out_t = pl.pallas_call(
        kernel,
        out_shape=jax.ShapeDtypeStruct((action_dim, batch), jnp.float32),
        grid=grid,
        in_specs=in_specs,
        out_specs=out_spec,
        compiler_params=pltpu.CompilerParams(
            # Independent batch tiles -> shard across v7x's 2 TensorCores.
            dimension_semantics=("parallel",),
        ),
    )(x, *params)

    # Tiny transpose back to the torch (batch, action_dim) layout.
    return out_t.T


class QNetPallas:
    """Pallas implementation of alkaid QNet (MLP core + optional dueling/softmax)."""

    def __init__(self, state_dim, action_dim, hidden_size=(32, 32),
                 softmax=False, dueling=False, key=None):
        self.state_dim = state_dim
        self.action_dim = action_dim
        self.softmax = softmax
        self.dueling = dueling

        sizes = [state_dim] + list(hidden_size) + [action_dim]
        core_sizes = sizes[:-1] if dueling else sizes
        self.n_core_layers = len(core_sizes) - 1

        if key is None:
            key = jax.random.PRNGKey(0)

        def make_linear(k, din, dout):
            # torch.nn.Linear layout (out, in) and U(-1/sqrt(in), 1/sqrt(in)) init.
            kw, kb = jax.random.split(k)
            bound = 1.0 / float(din) ** 0.5
            w = jax.random.uniform(kw, (dout, din), jnp.float32, -bound, bound)
            b = jax.random.uniform(kb, (dout, 1), jnp.float32, -bound, bound)
            return w, b

        params = []
        for din, dout in zip(core_sizes[:-1], core_sizes[1:]):
            key, sub = jax.random.split(key)
            w, b = make_linear(sub, din, dout)
            params += [w.astype(jnp.bfloat16), b]   # bf16 weights, f32 bias

        if dueling:
            core_out = core_sizes[-1]
            key, ka = jax.random.split(key)
            wa, ba = make_linear(ka, core_out, action_dim)   # advantage head
            key, kv = jax.random.split(key)
            wv, bv = make_linear(kv, core_out, 1)            # value head
            # Fuse heads: rows [0, A) = advantage, row A = value.
            w_head = jnp.concatenate([wa, wv], axis=0).astype(jnp.bfloat16)
            b_head = jnp.concatenate([ba, bv], axis=0)
            params += [w_head, b_head]

        self.params = tuple(params)

    def __call__(self, x):
        assert x.ndim == 2 and x.shape[1] == self.state_dim
        return _qnet_forward(
            x, self.params,
            n_core_layers=self.n_core_layers,
            dueling=self.dueling,
            softmax=self.softmax,
            action_dim=self.action_dim,
        )

    # Pure-JAX reference of the same math (for verification only).
    def reference(self, x):
        h = x.astype(jnp.float32)
        idx = 0
        for i in range(self.n_core_layers):
            w, b = self.params[idx], self.params[idx + 1]
            idx += 2
            h = jnp.dot(h.astype(jnp.bfloat16), w.T,
                        preferred_element_type=jnp.float32) + b[:, 0]
            if (i != self.n_core_layers - 1) or self.dueling:
                h = jnp.maximum(h, 0.0)
        if self.dueling:
            w_head, b_head = self.params[idx], self.params[idx + 1]
            y = jnp.dot(h.astype(jnp.bfloat16), w_head.T,
                        preferred_element_type=jnp.float32) + b_head[:, 0]
            adv = y[:, :self.action_dim]
            v = y[:, self.action_dim:]
            h = v + adv - jnp.mean(adv, axis=1, keepdims=True)
        if self.softmax:
            h = jax.nn.softmax(h, axis=-1)
        return h


if __name__ == "__main__":
    key = jax.random.PRNGKey(0)
    kx, kp1, kp2 = jax.random.split(key, 3)

    batch, state_dim, action_dim = 8, 16, 8
    x = jax.random.normal(kx, (batch, state_dim), jnp.float32)

    # 1) Plain QNet (ReLU hidden layers, no softmax, no dueling).
    net = QNetPallas(state_dim, action_dim, hidden_size=(32, 32),
                     softmax=False, dueling=False, key=kp1)
    out = jax.block_until_ready(net(x))
    assert out.shape == (batch, action_dim)
    assert jnp.allclose(out, net.reference(x), atol=1e-3, rtol=1e-3)

    # 2) Dueling QNet with softmax output (fused heads, approx reciprocal).
    net_d = QNetPallas(state_dim, action_dim, hidden_size=(32, 32),
                       softmax=True, dueling=True, key=kp2)
    out_d = jax.block_until_ready(net_d(x))
    assert out_d.shape == (batch, action_dim)
    assert jnp.allclose(jnp.sum(out_d, axis=-1), jnp.ones((batch,)), atol=5e-3)
    assert jnp.allclose(out_d, net_d.reference(x), atol=5e-3, rtol=5e-2)

    # 3) Batch not a multiple of 8 (single full-array block, no pad/slice).
    x_odd = jax.random.normal(kx, (5, state_dim), jnp.float32)
    out_odd = jax.block_until_ready(net(x_odd))
    assert out_odd.shape == (5, action_dim)
    assert jnp.allclose(out_odd, net.reference(x_odd), atol=1e-3, rtol=1e-3)

    # 4) Large batch -> 2-step grid with a masked partial last block.
    x_big = jax.random.normal(kx, (1500, state_dim), jnp.float32)
    out_big = jax.block_until_ready(net(x_big))
    assert out_big.shape == (1500, action_dim)
    assert jnp.allclose(out_big, net.reference(x_big), atol=1e-3, rtol=1e-3)

    # 5) Mid-size dueling+softmax batch (partial block + garbage-row masking).
    x_mid = jax.random.normal(kx, (300, state_dim), jnp.float32)
    out_mid = jax.block_until_ready(net_d(x_mid))
    assert out_mid.shape == (300, action_dim)
    assert jnp.allclose(out_mid, net_d.reference(x_mid), atol=5e-3, rtol=5e-2)

    print("KERNEL_OK")
</pallas_src>

<mosaic_0001>
module attributes {stable_mosaic.version = 11 : i64} {
  func.func @_qnet_kernel(%arg0: i32, %arg1: memref<8x16xf32, #tpu.memory_space<vmem>>, %arg2: memref<32x16xbf16, #tpu.memory_space<vmem>>, %arg3: memref<32x1xf32, #tpu.memory_space<vmem>>, %arg4: memref<32x32xbf16, #tpu.memory_space<vmem>>, %arg5: memref<32x1xf32, #tpu.memory_space<vmem>>, %arg6: memref<8x32xbf16, #tpu.memory_space<vmem>>, %arg7: memref<8x1xf32, #tpu.memory_space<vmem>>, %arg8: memref<8x8xf32, #tpu.memory_space<vmem>>) attributes {dimension_semantics = [#tpu.dimension_semantics<parallel>], iteration_bounds = array<i64: 1>, scalar_prefetch = 0 : i64, scratch_operands = 0 : i64, tpu.core_type = #tpu.core_type<tc>, window_params = [{transform_indices = @transform_0, window_bounds = array<i64: 8, 16>}, {pipeline_mode = #tpu.pipeline_mode<synchronous>, transform_indices = @transform_1, window_bounds = array<i64: 32, 16>}, {pipeline_mode = #tpu.pipeline_mode<synchronous>, transform_indices = @transform_2, window_bounds = array<i64: 32, 1>}, {pipeline_mode = #tpu.pipeline_mode<synchronous>, transform_indices = @transform_3, window_bounds = array<i64: 32, 32>}, {pipeline_mode = #tpu.pipeline_mode<synchronous>, transform_indices = @transform_4, window_bounds = array<i64: 32, 1>}, {pipeline_mode = #tpu.pipeline_mode<synchronous>, transform_indices = @transform_5, window_bounds = array<i64: 8, 32>}, {pipeline_mode = #tpu.pipeline_mode<synchronous>, transform_indices = @transform_6, window_bounds = array<i64: 8, 1>}, {transform_indices = @transform_7, window_bounds = array<i64: 8, 8>}]} {
    %c0 = arith.constant 0 : index
    %c0_0 = arith.constant 0 : index
    %0 = vector.load %arg1[%c0, %c0_0] : memref<8x16xf32, #tpu.memory_space<vmem>>, vector<8x16xf32>
    %c0_1 = arith.constant 0 : index
    %c0_2 = arith.constant 0 : index
    %1 = vector.load %arg2[%c0_1, %c0_2] : memref<32x16xbf16, #tpu.memory_space<vmem>>, vector<32x16xbf16>
    %c0_3 = arith.constant 0 : index
    %c0_4 = arith.constant 0 : index
    %2 = vector.load %arg3[%c0_3, %c0_4] : memref<32x1xf32, #tpu.memory_space<vmem>>, vector<32x1xf32>
    %3 = arith.truncf %0 : vector<8x16xf32> to vector<8x16xbf16>
    %cst = arith.constant dense<0.000000e+00> : vector<32x8xf32>
    %4 = tpu.matmul %1, %3, %cst {dimension_numbers = #tpu.dot_dimension_numbers<[1], [1], [0], [0], [0, 0, 1, 0], [], []>} : vector<32x16xbf16>, vector<8x16xbf16>, vector<32x8xf32> -> vector<32x8xf32>
    %5 = vector.broadcast %2 : vector<32x1xf32> to vector<32x8xf32>
    %6 = arith.addf %4, %5 : vector<32x8xf32>
    %cst_5 = arith.constant 0.000000e+00 : f32
    %7 = vector.broadcast %cst_5 : f32 to vector<32x8xf32>
    %8 = arith.maximumf %6, %7 : vector<32x8xf32>
    %c0_6 = arith.constant 0 : index
    %c0_7 = arith.constant 0 : index
    %9 = vector.load %arg4[%c0_6, %c0_7] : memref<32x32xbf16, #tpu.memory_space<vmem>>, vector<32x32xbf16>
    %c0_8 = arith.constant 0 : index
    %c0_9 = arith.constant 0 : index
    %10 = vector.load %arg5[%c0_8, %c0_9] : memref<32x1xf32, #tpu.memory_space<vmem>>, vector<32x1xf32>
    %11 = arith.truncf %8 : vector<32x8xf32> to vector<32x8xbf16>
    %cst_10 = arith.constant dense<0.000000e+00> : vector<32x8xf32>
    %12 = tpu.matmul %9, %11, %cst_10 {dimension_numbers = #tpu.dot_dimension_numbers<[1], [0], [0], [1], [0, 0, 1, 1], [], []>} : vector<32x32xbf16>, vector<32x8xbf16>, vector<32x8xf32> -> vector<32x8xf32>
    %13 = vector.broadcast %10 : vector<32x1xf32> to vector<32x8xf32>
    %14 = arith.addf %12, %13 : vector<32x8xf32>
    %cst_11 = arith.constant 0.000000e+00 : f32
    %15 = vector.broadcast %cst_11 : f32 to vector<32x8xf32>
    %16 = arith.maximumf %14, %15 : vector<32x8xf32>
    %c0_12 = arith.constant 0 : index
    %c0_13 = arith.constant 0 : index
    %17 = vector.load %arg6[%c0_12, %c0_13] : memref<8x32xbf16, #tpu.memory_space<vmem>>, vector<8x32xbf16>
    %c0_14 = arith.constant 0 : index
    %c0_15 = arith.constant 0 : index
    %18 = vector.load %arg7[%c0_14, %c0_15] : memref<8x1xf32, #tpu.memory_space<vmem>>, vector<8x1xf32>
    %19 = arith.truncf %16 : vector<32x8xf32> to vector<32x8xbf16>
    %cst_16 = arith.constant dense<0.000000e+00> : vector<8x8xf32>
    %20 = tpu.matmul %17, %19, %cst_16 {dimension_numbers = #tpu.dot_dimension_numbers<[1], [0], [0], [1], [0, 0, 1, 1], [], []>} : vector<8x32xbf16>, vector<32x8xbf16>, vector<8x8xf32> -> vector<8x8xf32>
    %21 = vector.broadcast %18 : vector<8x1xf32> to vector<8x8xf32>
    %22 = arith.addf %20, %21 : vector<8x8xf32>
    %c0_17 = arith.constant 0 : index
    %c0_18 = arith.constant 0 : index
    %23 = vector.load %arg8[%c0_17, %c0_18] : memref<8x8xf32, #tpu.memory_space<vmem>>, vector<8x8xf32>
    tpu.vector_store %arg8[%c0_17, %c0_18], %22 {strides = array<i32>} : memref<8x8xf32, #tpu.memory_space<vmem>>, vector<8x8xf32>,
    return
  }
  func.func @transform_0(%arg0: i32) -> (i32, i32) {
    %c0_i32 = arith.constant 0 : i32
    %c0_i32_0 = arith.constant 0 : i32
    return %arg0, %c0_i32 : i32, i32
  }
  func.func @transform_1(%arg0: i32) -> (i32, i32) {
    %c0_i32 = arith.constant 0 : i32
    %c0_i32_0 = arith.constant 0 : i32
    %c0_i32_1 = arith.constant 0 : i32
    return %c0_i32, %c0_i32_0 : i32, i32
  }
  func.func @transform_2(%arg0: i32) -> (i32, i32) {
    %c0_i32 = arith.constant 0 : i32
    %c0_i32_0 = arith.constant 0 : i32
    %c0_i32_1 = arith.constant 0 : i32
    return %c0_i32, %c0_i32_0 : i32, i32
  }
  func.func @transform_3(%arg0: i32) -> (i32, i32) {
    %c0_i32 = arith.constant 0 : i32
    %c0_i32_0 = arith.constant 0 : i32
    %c0_i32_1 = arith.constant 0 : i32
    return %c0_i32, %c0_i32_0 : i32, i32
  }
  func.func @transform_4(%arg0: i32) -> (i32, i32) {
    %c0_i32 = arith.constant 0 : i32
    %c0_i32_0 = arith.constant 0 : i32
    %c0_i32_1 = arith.constant 0 : i32
    return %c0_i32, %c0_i32_0 : i32, i32
  }
  func.func @transform_5(%arg0: i32) -> (i32, i32) {
    %c0_i32 = arith.constant 0 : i32
    %c0_i32_0 = arith.constant 0 : i32
    %c0_i32_1 = arith.constant 0 : i32
    return %c0_i32, %c0_i32_0 : i32, i32
  }
  func.func @transform_6(%arg0: i32) -> (i32, i32) {
    %c0_i32 = arith.constant 0 : i32
    %c0_i32_0 = arith.constant 0 : i32
    %c0_i32_1 = arith.constant 0 : i32
    return %c0_i32, %c0_i32_0 : i32, i32
  }
  func.func @transform_7(%arg0: i32) -> (i32, i32) {
    %c0_i32 = arith.constant 0 : i32
    %c0_i32_0 = arith.constant 0 : i32
    return %c0_i32, %arg0 : i32, i32
  }
}

</mosaic_0001>

<llo_original>
// kernel: _qnet_forward.1
$region0: #{_qnet_forward.1}
  #allocation0 [shape = 'u32[]', space=smem, size = 0x4, offset = 0x4, fixed_abs, tag = 'smem constant byte address 0x4 - core index']
  #allocation1 [shape = 'u32[72,128]{1,0:T(1,128)}', space=vmem, size = 0x9000, scoped, tag = 'internal scratch']
  %s0 = inlined_call_operand.vmem [shape: f32[8,16], index: 0, kind: input, shape index: {}]
  %s1 = inlined_call_operand.vmem [shape: bf16[32,16], index: 1, kind: input, shape index: {}]
  %s2 = inlined_call_operand.vmem [shape: f32[32,1], index: 2, kind: input, shape index: {}]
  %s3 = inlined_call_operand.vmem [shape: bf16[32,32], index: 3, kind: input, shape index: {}]
  %s4 = inlined_call_operand.vmem [shape: f32[32,1], index: 4, kind: input, shape index: {}]
  %s5 = inlined_call_operand.vmem [shape: bf16[8,32], index: 5, kind: input, shape index: {}]
  %s6 = inlined_call_operand.vmem [shape: f32[8,1], index: 6, kind: input, shape index: {}]
  %s7 = inlined_call_operand.vmem [shape: f32[8,8], index: 7, kind: output, shape index: {}]
  %s8 = sld [smem:[#allocation0]]
  $region38: #{_qnet_forward.1} parent=0
    _
  %s10 = ssub.s32 1, %s8
  %s11 = scalar_select 0, %s10, %s8
  // Predicated region
  $region2: #{_qnet_forward.1} parent=0 // pred_check
    _
  $region3: #{_qnet_forward.1} parent=0 // pred_check_branch
    %13 = sbr.rel (0) target = $region5
  $region4: #{_qnet_forward.1} parent=0 // pred_region
    _
  $region5: #{_qnet_forward.1} parent=0 // pred_fallthru
    _
  // Predicated region
  $region6: #{_qnet_forward.1} parent=0 // pred_check
    _
  $region7: #{_qnet_forward.1} parent=0 // pred_check_branch
    %15 = sbr.rel (0) target = $region9
  $region8: #{_qnet_forward.1} parent=0 // pred_region
    _
  $region9: #{_qnet_forward.1} parent=0 // pred_fallthru
    _
  // Predicated region
  $region10: #{_qnet_forward.1} parent=0 // pred_check
    _
  $region11: #{_qnet_forward.1} parent=0 // pred_check_branch
    %17 = sbr.rel (0) target = $region13
  $region12: #{_qnet_forward.1} parent=0 // pred_region
    _
  $region13: #{_qnet_forward.1} parent=0 // pred_fallthru
    _
  // Predicated region
  $region14: #{_qnet_forward.1} parent=0 // pred_check
    _
  $region15: #{_qnet_forward.1} parent=0 // pred_check_branch
    %19 = sbr.rel (0) target = $region17
  $region16: #{_qnet_forward.1} parent=0 // pred_region
    _
  $region17: #{_qnet_forward.1} parent=0 // pred_fallthru
    _
  // Predicated region
  $region18: #{_qnet_forward.1} parent=0 // pred_check
    _
  $region19: #{_qnet_forward.1} parent=0 // pred_check_branch
    %21 = sbr.rel (0) target = $region21
  $region20: #{_qnet_forward.1} parent=0 // pred_region
    _
  $region21: #{_qnet_forward.1} parent=0 // pred_fallthru
    _
  // Predicated region
  $region22: #{_qnet_forward.1} parent=0 // pred_check
    _
  $region23: #{_qnet_forward.1} parent=0 // pred_check_branch
    %23 = sbr.rel (0) target = $region25
  $region24: #{_qnet_forward.1} parent=0 // pred_region
    _
  $region25: #{_qnet_forward.1} parent=0 // pred_fallthru
    _
  // Predicated region
  $region26: #{_qnet_forward.1} parent=0 // pred_check
    _
  $region27: #{_qnet_forward.1} parent=0 // pred_check_branch
    %25 = sbr.rel (0) target = $region29
  $region28: #{_qnet_forward.1} parent=0 // pred_region
    _
  $region29: #{_qnet_forward.1} parent=0 // pred_fallthru
    _
  %v27 = vld [vmem:[%s0] sm:$0xff]
  %v28 = vld [vmem:[%s1] sm:$0xf]
  %v29 = vld [vmem:[%s1 + $0x4] sm:$0xf]
  %v30 = vld [vmem:[%s1 + $0x8] sm:$0xf]
  %v31 = vld [vmem:[%s1 + $0xc] sm:$0xf]
  %v32 = vld [vmem:[%s2] sm:$0xff]
  %v33 = vld [vmem:[%s2 + $0x8] sm:$0xff]
  %v34 = vld [vmem:[%s2 + $0x10] sm:$0xff]
  %v35 = vld [vmem:[%s2 + $0x18] sm:$0xff]
  %v36 = vpack.c.bf16 %v27, %v27
  %38 = vset.pattern.permute.xlu0 0
  %39 = vperm.xlu0 %38, %v32
  %v40 = vpop.permute.xlu0 %39
  %43 = vset.pattern.permute.xlu0 0
  %44 = vperm.xlu0 %43, %v33
  %v45 = vpop.permute.xlu0 %44
  %48 = vset.pattern.permute.xlu0 0
  %49 = vperm.xlu0 %48, %v34
  %v50 = vpop.permute.xlu0 %49
  %53 = vset.pattern.permute.xlu0 0
  %54 = vperm.xlu0 %53, %v35
  %v55 = vpop.permute.xlu0 %54
  %v61 = vunpack.c.l.b16 %v28
  %v62 = vunpack.c.l.b16 %v29
  %v63 = vunpack.c.l.b16 %v30
  %v64 = vunpack.c.l.b16 %v31
  %v65 = vpack.c.b16 %v62, %v61
  %v66 = vpack.c.b16 %v64, %v63
  %vm67 = vcmask 130048
  %v69 = vsel %vm67, %v65, 0
  %v72 = vsel %vm67, %v66, 0
  %v75 = vsel %vm67, %v36, 0
  %77 = vmatpush.bf16.xpose.msra.mxu0 0
  %78 = vmatpush.bf16.xpose.msra.mxu0 0
  %79 = vmatpush.bf16.xpose.msra.mxu0 0
  %80 = vmatpush.bf16.xpose.msra.mxu0 0
  %81 = vmatpush.bf16.xpose.msra.mxu0 0
  %82 = vmatpush.bf16.xpose.msra.mxu0 0
  %83 = vmatpush.bf16.xpose.msra.mxu0 0
  %84 = vmatpush.bf16.xpose.msra.mxu0 %v75
  %85 = vmatmul.bf16.gmra.mxu0 %v69
  %v86 = vpop.f32.mrf.mxu0
  %v87 = vadd.f32 %v40, %v86
  %v88 = vpop.f32.mrf.mxu0
  %v89 = vadd.f32 %v45, %v88
  %90 = vmatmul.bf16.gmra.mxu0 %v72
  %v91 = vpop.f32.mrf.mxu0
  %v92 = vadd.f32 %v50, %v91
  %v93 = vpop.f32.mrf.mxu0
  %v94 = vadd.f32 %v55, %v93
  %95 = vdwg.mxu0
  %v96 = vmax.f32 %v87, 0.0
  %v97 = vmax.f32 %v89, 0.0
  %v98 = vmax.f32 %v92, 0.0
  %v99 = vmax.f32 %v94, 0.0
  %v100 = vld [vmem:[%s3] sm:$0xf]
  %v101 = vld [vmem:[%s3 + $0x4] sm:$0xf]
  %v102 = vld [vmem:[%s3 + $0x8] sm:$0xf]
  %v103 = vld [vmem:[%s3 + $0xc] sm:$0xf]
  %v104 = vld [vmem:[%s4] sm:$0xff]
  %v105 = vld [vmem:[%s4 + $0x8] sm:$0xff]
  %v106 = vld [vmem:[%s4 + $0x10] sm:$0xff]
  %v107 = vld [vmem:[%s4 + $0x18] sm:$0xff]
  %v108 = vpack.c.bf16 %v97, %v96
  %v109 = vpack.c.bf16 %v99, %v98
  %111 = vset.pattern.permute.xlu0 0
  %112 = vperm.xlu0 %111, %v104
  %v113 = vpop.permute.xlu0 %112
  %116 = vset.pattern.permute.xlu0 0
  %117 = vperm.xlu0 %116, %v105
  %v118 = vpop.permute.xlu0 %117
  %121 = vset.pattern.permute.xlu0 0
  %122 = vperm.xlu0 %121, %v106
  %v123 = vpop.permute.xlu0 %122
  %126 = vset.pattern.permute.xlu0 0
  %127 = vperm.xlu0 %126, %v107
  %v128 = vpop.permute.xlu0 %127
  %v134 = vunpack.c.l.b16 %v100
  %v135 = vunpack.c.l.b16 %v101
  %v136 = vunpack.c.l.b16 %v102
  %v137 = vunpack.c.l.b16 %v103
  %v138 = vpack.c.b16 %v135, %v134
  %v139 = vpack.c.b16 %v137, %v136
  %vm140 = vcmask 261120
  %v142 = vsel %vm140, %v138, 0
  %v145 = vsel %vm140, %v139, 0
  %147 = vmatpush.bf16.msra.mxu0 0
  %148 = vmatpush.bf16.msra.mxu0 0
  %149 = vmatpush.bf16.msra.mxu0 0
  %150 = vmatpush.bf16.msra.mxu0 0
  %151 = vmatpush.bf16.msra.mxu0 0
  %152 = vmatpush.bf16.msra.mxu0 0
  %153 = vmatpush.bf16.msra.mxu0 %v109
  %154 = vmatpush.bf16.msra.mxu0 %v108
  %155 = vmatmul.bf16.gmra.mxu0 %v142
  %v156 = vpop.f32.mrf.mxu0
  %v157 = vadd.f32 %v113, %v156
  %v158 = vpop.f32.mrf.mxu0
  %v159 = vadd.f32 %v118, %v158
  %160 = vmatmul.bf16.gmra.mxu0 %v145
  %v161 = vpop.f32.mrf.mxu0
  %v162 = vadd.f32 %v123, %v161
  %v163 = vpop.f32.mrf.mxu0
  %v164 = vadd.f32 %v128, %v163
  %165 = vdwg.mxu0
  %v166 = vmax.f32 %v157, 0.0
  %v167 = vmax.f32 %v159, 0.0
  %v168 = vmax.f32 %v162, 0.0
  %v169 = vmax.f32 %v164, 0.0
  %v170 = vld [vmem:[%s5] sm:$0xf]
  %v171 = vld [vmem:[%s6] sm:$0xff]
  %v172 = vpack.c.bf16 %v167, %v166
  %v173 = vpack.c.bf16 %v169, %v168
  %175 = vset.pattern.permute.xlu0 0
  %176 = vperm.xlu0 %175, %v171
  %v177 = vpop.permute.xlu0 %176
  %v180 = vsel %vm140, %v170, 0
  %182 = vmatpush.bf16.msra.mxu0 0
  %183 = vmatpush.bf16.msra.mxu0 0
  %184 = vmatpush.bf16.msra.mxu0 0
  %185 = vmatpush.bf16.msra.mxu0 0
  %186 = vmatpush.bf16.msra.mxu0 0
  %187 = vmatpush.bf16.msra.mxu0 0
  %188 = vmatpush.bf16.msra.mxu0 %v173
  %189 = vmatpush.bf16.msra.mxu0 %v172
  %190 = vmatmul.bf16.gmra.mxu0 %v180
  %v191 = vpop.f32.mrf.mxu0
  %v192 = vadd.f32 %v177, %v191
  %v193 = vpop.f32.mrf.mxu0
  %194 = vdwg.mxu0
  %vm195 = vcmask 64512
  %196 = vst.msk [vmem:[%s7] sm:$0xff] %vm195, %v192
  // Predicated region
  $region30: #{_qnet_forward.1} parent=0 // pred_check
    _
  $region31: #{_qnet_forward.1} parent=0 // pred_check_branch
    %198 = sbr.rel (0) target = $region33
  $region32: #{_qnet_forward.1} parent=0 // pred_region
    _
  $region33: #{_qnet_forward.1} parent=0 // pred_fallthru
    _
  // Predicated region
  $region34: #{_qnet_forward.1} parent=0 // pred_check
    _
  $region35: #{_qnet_forward.1} parent=0 // pred_check_branch
    %200 = sbr.rel (0) target = $region37
  $region36: #{_qnet_forward.1} parent=0 // pred_region
    _
  $region37: #{_qnet_forward.1} parent=0 // pred_fallthru
    _

</llo_original>
